<compile_context>
chip_gen: v6e
topology: v6e:2x2x1
jax: 0.10.0
libtpu: 0.0.40
codegen_flags: <defaults>
</compile_context>

<pallas_src>
import math

import jax
import jax.numpy as jnp
from jax.experimental import pallas as pl
from jax.experimental.pallas import tpu as pltpu


def _round_up(v, m):
    return ((v + m - 1) // m) * m


def _vmem_capacity_bytes():
    """Physical VMEM per TensorCore; conservative fallback if unknown."""
    try:
        info = pltpu.get_tpu_info()
        cap = getattr(info, "vmem_capacity_bytes", None)
        if cap:
            return int(cap)
    except Exception:
        pass
    return 64 << 20  # v7x-sized conservative default


def _classifier_kernel(x_ref, w_ref, bias_ref, o_ref, acc_ref):
    k = pl.program_id(1)

    @pl.when(k == 0)
    def _init():
        acc_ref[...] = jnp.zeros_like(acc_ref)

    # MXU matmul: cast x f32 -> bf16 in-kernel (no separate HBM cast pass),
    # accumulate in f32.
    acc_ref[...] += jnp.dot(
        x_ref[...].astype(jnp.bfloat16),
        w_ref[...],
        preferred_element_type=jnp.float32,
    )

    @pl.when(k == pl.num_programs(1) - 1)
    def _finalize():
        # bias row is 0 for real classes, -1e30 for padded lanes.
        y = acc_ref[...] + bias_ref[...]
        m = jnp.max(y, axis=-1, keepdims=True)
        shifted = y - m
        lse = jnp.log(jnp.sum(jnp.exp(shifted), axis=-1, keepdims=True))
        o_ref[...] = (shifted - lse).astype(o_ref.dtype)


def classifier_forward(x, w, *, block_b=None):
    """x: [B, n_in] f32, w: [n_in, n_out] f32 (pre-transposed torch weight)
    -> [B, n_out] f32 log-probabilities."""
    B, n_in = x.shape
    n_in_w, n_out = w.shape
    assert n_in == n_in_w

    # Lane-dense output: pad class dim up to a multiple of 128.
    n_out_p = _round_up(n_out, 128)

    # ---- per-generation VMEM budget --------------------------------------
    vmem_cap = _vmem_capacity_bytes()
    budget = (vmem_cap * 3) // 4          # headroom for Mosaic scratch etc.

    # ---- choose block_k (K tiling of n_in) --------------------------------
    w_budget = int(budget * 0.4)
    w_bytes_single = n_in * n_out_p * 2   # bf16, single-buffered
    if w_bytes_single <= w_budget:
        block_k = n_in                    # whole reduction dim in one slab
        n_in_p = n_in
        num_k = 1
    else:
        # Double-buffered (block_k, n_out_p) bf16 slabs must fit w_budget.
        block_k = max(128, ((w_budget // (2 * n_out_p * 2)) // 128) * 128)
        n_in_p = _round_up(n_in, block_k)
        num_k = n_in_p // block_k

    # ---- choose block_b ----------------------------------------------------
    # per-row VMEM cost:
    #   x tile (f32, double-buffered) + out tile (f32, double-buffered)
    #   + f32 accumulator scratch + f32 temps headroom
    per_row = 2 * block_k * 4 + 2 * n_out_p * 4 + n_out_p * 4 + 2 * n_out_p * 4
    w_fixed = (block_k * n_out_p * 2) if num_k == 1 else (2 * block_k * n_out_p * 2)
    bias_fixed = 2 * n_out_p * 4
    avail = budget - w_fixed - bias_fixed - (2 << 20)
    max_rows = max(16, (avail // per_row) // 16 * 16)

    if block_b is None:
        # >=2 grid steps when there is enough work; cap at 512 rows.
        block_b = min(512, max(16, _round_up(-(-B // 2), 16)))
    block_b = max(16, _round_up(block_b, 16))
    block_b = min(block_b, max_rows)

    B_pad = _round_up(B, block_b)
    grid = (B_pad // block_b, num_k)

    # ---- wrapper-side prep (weight cast is one-time & tiny; x stays f32) ---
    wb = w.astype(jnp.bfloat16)
    if n_out_p != n_out:
        wb = jnp.pad(wb, ((0, 0), (0, n_out_p - n_out)))
    xp = x
    if n_in_p != n_in:
        wb = jnp.pad(wb, ((0, n_in_p - n_in), (0, 0)))
        xp = jnp.pad(xp, ((0, 0), (0, n_in_p - n_in)))
    if B_pad != B:
        xp = jnp.pad(xp, ((0, B_pad - B), (0, 0)))

    # Additive mask row: 0 for valid classes, -1e30 for padded lanes.
    bias = jnp.where(jnp.arange(n_out_p) < n_out,
                     jnp.float32(0.0), jnp.float32(-1e30)).reshape(1, n_out_p)

    # ---- BlockSpecs --------------------------------------------------------
    x_spec = pl.BlockSpec((block_b, block_k), lambda i, k: (i, k))
    if num_k == 1:
        # Constant index_map: never refetched -> single-buffer to save VMEM.
        w_spec = pl.BlockSpec((block_k, n_out_p), lambda i, k: (k, 0),
                              pipeline_mode=pl.Buffered(1))
    else:
        w_spec = pl.BlockSpec((block_k, n_out_p), lambda i, k: (k, 0))
    bias_spec = pl.BlockSpec((1, n_out_p), lambda i, k: (0, 0))
    out_spec = pl.BlockSpec((block_b, n_out_p), lambda i, k: (i, 0))

    # ---- compiler hints ----------------------------------------------------
    needed = w_fixed + bias_fixed + block_b * per_row + (4 << 20)
    vmem_limit = int(min(max(needed, 16 << 20), budget))

    cost = pl.CostEstimate(
        flops=2 * B_pad * n_in_p * n_out_p,
        transcendentals=B_pad * n_out_p,
        bytes_accessed=B_pad * n_in_p * 4 + n_in_p * n_out_p * 2
        + B_pad * n_out_p * 4 + n_out_p * 4,
    )

    out = pl.pallas_call(
        _classifier_kernel,
        out_shape=jax.ShapeDtypeStruct((B_pad, n_out_p), jnp.float32),
        grid_spec=pltpu.PrefetchScalarGridSpec(
            num_scalar_prefetch=0,
            grid=grid,
            in_specs=[x_spec, w_spec, bias_spec],
            out_specs=out_spec,
            scratch_shapes=[pltpu.VMEM((block_b, n_out_p), jnp.float32)],
        ),
        compiler_params=pltpu.CompilerParams(
            dimension_semantics=("parallel", "arbitrary"),
            vmem_limit_bytes=vmem_limit,
        ),
        cost_estimate=cost,
    )(xp, wb, bias)

    # Slice away batch / class padding.
    return out[:B, :n_out]


def xavier_uniform(key, n_out, n_in, dtype=jnp.float32):
    # Matches torch.nn.init.xavier_uniform_ for a [n_out, n_in] weight.
    limit = math.sqrt(6.0 / (n_in + n_out))
    return jax.random.uniform(key, (n_out, n_in), dtype=dtype,
                              minval=-limit, maxval=limit)


if __name__ == "__main__":
    key = jax.random.PRNGKey(0)
    k_x, k_w = jax.random.split(key)

    B, n_in, n_out = 8, 32, 16
    x = jax.random.normal(k_x, (B, n_in), dtype=jnp.float32)
    # PyTorch linear weight is [n_out, n_in]; pre-transpose for the kernel.
    w_torch_layout = xavier_uniform(k_w, n_out, n_in)
    w = w_torch_layout.T  # [n_in, n_out]

    out = classifier_forward(x, w)
    out = jax.block_until_ready(out)
    assert out.shape == (B, n_out)

    # Reference along the same bf16-input / f32-accumulate path.
    y_ref = jnp.dot(x.astype(jnp.bfloat16), w.astype(jnp.bfloat16),
                    preferred_element_type=jnp.float32)
    ref = jax.nn.log_softmax(y_ref, axis=-1)
    assert jnp.allclose(out, ref, atol=1e-3, rtol=1e-3)

    # Loose sanity check against the full-f32 reference (bf16 quantization).
    ref_f32 = jax.nn.log_softmax(x @ w, axis=-1)
    assert jnp.allclose(out, ref_f32, atol=1e-1, rtol=1e-1)

    print("KERNEL_OK")
</pallas_src>

<mosaic_0001>
module attributes {stable_mosaic.version = 11 : i64} {
  func.func @_classifier_kernel(%arg0: i32, %arg1: i32, %arg2: memref<16x32xf32, #tpu.memory_space<vmem>>, %arg3: memref<32x128xbf16, #tpu.memory_space<vmem>>, %arg4: memref<1x128xf32, #tpu.memory_space<vmem>>, %arg5: memref<16x128xf32, #tpu.memory_space<vmem>>, %arg6: memref<16x128xf32, #tpu.memory_space<vmem>>) attributes {dimension_semantics = [#tpu.dimension_semantics<parallel>, #tpu.dimension_semantics<arbitrary>], iteration_bounds = array<i64: 1, 1>, scalar_prefetch = 0 : i64, scratch_operands = 1 : i64, tpu.core_type = #tpu.core_type<tc>, window_params = [{transform_indices = @transform_0, window_bounds = array<i64: 16, 32>}, {pipeline_mode = #tpu.pipeline_mode<synchronous>, transform_indices = @transform_1, window_bounds = array<i64: 32, 128>}, {pipeline_mode = #tpu.pipeline_mode<synchronous>, transform_indices = @transform_2, window_bounds = array<i64: 1, 128>}, {transform_indices = @transform_3, window_bounds = array<i64: 16, 128>}]} {
    %c0_i32 = arith.constant 0 : i32
    %0 = arith.cmpi eq, %arg1, %c0_i32 : i32
    %1 = arith.extui %0 : i1 to i32
    %c0_i32_0 = arith.constant 0 : i32
    %2 = arith.cmpi ne, %1, %c0_i32_0 : i32
    scf.if %2 {
      %cst_10 = arith.constant 0.000000e+00 : f32
      %13 = vector.broadcast %cst_10 : f32 to vector<16x128xf32>
      %c0_11 = arith.constant 0 : index
      %c0_12 = arith.constant 0 : index
      %14 = vector.load %arg6[%c0_11, %c0_12] : memref<16x128xf32, #tpu.memory_space<vmem>>, vector<16x128xf32>
      tpu.vector_store %arg6[%c0_11, %c0_12], %13 {strides = array<i32>} : memref<16x128xf32, #tpu.memory_space<vmem>>, vector<16x128xf32>,
    } else {
    }
    %c0 = arith.constant 0 : index
    %c0_1 = arith.constant 0 : index
    %3 = vector.load %arg6[%c0, %c0_1] : memref<16x128xf32, #tpu.memory_space<vmem>>, vector<16x128xf32>
    %c0_2 = arith.constant 0 : index
    %c0_3 = arith.constant 0 : index
    %4 = vector.load %arg2[%c0_2, %c0_3] : memref<16x32xf32, #tpu.memory_space<vmem>>, vector<16x32xf32>
    %5 = arith.truncf %4 : vector<16x32xf32> to vector<16x32xbf16>
    %c0_4 = arith.constant 0 : index
    %c0_5 = arith.constant 0 : index
    %6 = vector.load %arg3[%c0_4, %c0_5] : memref<32x128xbf16, #tpu.memory_space<vmem>>, vector<32x128xbf16>
    %cst = arith.constant dense<0.000000e+00> : vector<16x128xf32>
    %7 = tpu.matmul %5, %6, %cst {dimension_numbers = #tpu.dot_dimension_numbers<[1], [0], [0], [1], [0, 0, 1, 1], [], []>} : vector<16x32xbf16>, vector<32x128xbf16>, vector<16x128xf32> -> vector<16x128xf32>
    %8 = arith.addf %3, %7 : vector<16x128xf32>
    %c0_6 = arith.constant 0 : index
    %c0_7 = arith.constant 0 : index
    %9 = vector.load %arg6[%c0_6, %c0_7] : memref<16x128xf32, #tpu.memory_space<vmem>>, vector<16x128xf32>
    tpu.vector_store %arg6[%c0_6, %c0_7], %8 {strides = array<i32>} : memref<16x128xf32, #tpu.memory_space<vmem>>, vector<16x128xf32>,
    %c0_i32_8 = arith.constant 0 : i32
    %10 = arith.cmpi eq, %arg1, %c0_i32_8 : i32
    %11 = arith.extui %10 : i1 to i32
    %c0_i32_9 = arith.constant 0 : i32
    %12 = arith.cmpi ne, %11, %c0_i32_9 : i32
    scf.if %12 {
      %c0_10 = arith.constant 0 : index
      %c0_11 = arith.constant 0 : index
      %13 = vector.load %arg6[%c0_10, %c0_11] : memref<16x128xf32, #tpu.memory_space<vmem>>, vector<16x128xf32>
      %c0_12 = arith.constant 0 : index
      %c0_13 = arith.constant 0 : index
      %14 = vector.load %arg4[%c0_12, %c0_13] : memref<1x128xf32, #tpu.memory_space<vmem>>, vector<1x128xf32>
      %15 = vector.broadcast %14 : vector<1x128xf32> to vector<16x128xf32>
      %16 = arith.addf %13, %15 : vector<16x128xf32>
      %cst_14 = arith.constant dense<0xFF800000> : vector<16xf32>
      %17 = vector.multi_reduction <maximumf>, %16, %cst_14 [1] : vector<16x128xf32> to vector<16xf32>
      %18 = vector.shape_cast %17 : vector<16xf32> to vector<16x1xf32>
      %19 = vector.broadcast %18 : vector<16x1xf32> to vector<16x128xf32>
      %20 = arith.subf %16, %19 : vector<16x128xf32>
      %21 = math.exp %20 : vector<16x128xf32>
      %cst_15 = arith.constant dense<0.000000e+00> : vector<16xf32>
      %22 = vector.multi_reduction <add>, %21, %cst_15 [1] : vector<16x128xf32> to vector<16xf32>
      %23 = vector.shape_cast %22 : vector<16xf32> to vector<16x1xf32>
      %24 = math.log %23 : vector<16x1xf32>
      %25 = vector.broadcast %24 : vector<16x1xf32> to vector<16x128xf32>
      %26 = arith.subf %20, %25 : vector<16x128xf32>
      %c0_16 = arith.constant 0 : index
      %c0_17 = arith.constant 0 : index
      %27 = vector.load %arg5[%c0_16, %c0_17] : memref<16x128xf32, #tpu.memory_space<vmem>>, vector<16x128xf32>
      tpu.vector_store %arg5[%c0_16, %c0_17], %26 {strides = array<i32>} : memref<16x128xf32, #tpu.memory_space<vmem>>, vector<16x128xf32>,
    } else {
    }
    return
  }
  func.func @transform_0(%arg0: i32, %arg1: i32) -> (i32, i32) {
    %c0_i32 = arith.constant 0 : i32
    return %arg0, %arg1 : i32, i32
  }
  func.func @transform_1(%arg0: i32, %arg1: i32) -> (i32, i32) {
    %c0_i32 = arith.constant 0 : i32
    %c0_i32_0 = arith.constant 0 : i32
    return %arg1, %c0_i32 : i32, i32
  }
  func.func @transform_2(%arg0: i32, %arg1: i32) -> (i32, i32) {
    %c0_i32 = arith.constant 0 : i32
    %c0_i32_0 = arith.constant 0 : i32
    %c0_i32_1 = arith.constant 0 : i32
    return %c0_i32, %c0_i32_0 : i32, i32
  }
  func.func @transform_3(%arg0: i32, %arg1: i32) -> (i32, i32) {
    %c0_i32 = arith.constant 0 : i32
    %c0_i32_0 = arith.constant 0 : i32
    return %arg0, %c0_i32 : i32, i32
  }
}

</mosaic_0001>

<llo_original>
// kernel: tpu_custom_call.1
$region0: #{tpu_custom_call.1}
  #allocation0 [shape = 'u32[]', space=smem, size = 0x4, offset = 0x4, fixed_abs, tag = 'smem constant byte address 0x4 - core index']
  #allocation1 [shape = 'u32[144,128]{1,0:T(1,128)}', space=vmem, size = 0x12000, scoped, tag = 'internal scratch']
  #allocation2 [shape = 'f32[16,128]{1,0:T(8,128)}', space=vmem, size = 0x2000, scoped, tag = 'scratch operand']
  %s0 = inlined_call_operand.hbm [shape: f32[16,32], index: 0, kind: input, shape index: {}]
  %s1 = inlined_call_operand.hbm [shape: bf16[32,128], index: 1, kind: input, shape index: {}]
  %s2 = inlined_call_operand.vmem [shape: f32[1,128], index: 2, kind: input, shape index: {}]
  %s3 = inlined_call_operand.hbm [shape: f32[16,128], index: 3, kind: output, shape index: {}]
  %s4 = sld [smem:[#allocation0]]
  $region38: #{tpu_custom_call.1} parent=0
    _
  %s6 = ssub.s32 1, %s4
  %s7 = scalar_select 0, %s6, %s4
  $region1: #{tpu_custom_call.1} parent=0
    #allocation3 [shape = 'u8[8192]{0}', space=vmem, size = 0x2000, scoped, tag = 'input window, operand 0, single buffered']
    #allocation4 [shape = 's32[1]{0}', space=sflag, size = 0x4, scoped, tag = 'scoped memory for tpu_custom_call.1']
    #allocation5 [shape = 's32[1]{0}', space=sflag, size = 0x4, scoped, tag = 'scoped memory for tpu_custom_call.1']
    #allocation6 [shape = 'u8[8192]{0}', space=vmem, size = 0x2000, scoped, tag = 'input window, operand 1, single buffered']
    #allocation7 [shape = 's32[1]{0}', space=sflag, size = 0x4, scoped, tag = 'scoped memory for tpu_custom_call.1']
    #allocation8 [shape = 'u8[8192]{0}', space=vmem, size = 0x2000, scoped, tag = 'output window, operand 0, single buffered']
    %8 = vsyncpa [#allocation4], 0
    %9 = vsyncpa [#allocation7], 0
    %10 = vsyncpa [#allocation5], 0
    // Predicated region
    $region2: #{tpu_custom_call.1} parent=1 // pred_check
      _
    $region3: #{tpu_custom_call.1} parent=1 // pred_check_branch
      %12 = sbr.rel (0) target = $region5
    $region4: #{tpu_custom_call.1} parent=1 // pred_region
      %s14 = ssub.s32 256, 256
      %15 = vsyncadd [#allocation4], %s14
      %s16 = sshll.u32 [#allocation3], 4
      %s17 = int_to_ptr.vmem [resolvable:$true] %s16
      %22 = dma.hbm_to_vmem [thread:$0]  %s0, 256, %s17, [#allocation4], 128, 128, 8
    $region5: #{tpu_custom_call.1} parent=1 // pred_fallthru
      _
    // Predicated region
    $region6: #{tpu_custom_call.1} parent=1 // pred_check
      _
    $region7: #{tpu_custom_call.1} parent=1 // pred_check_branch
      %24 = sbr.rel (0) target = $region9
    $region8: #{tpu_custom_call.1} parent=1 // pred_region
      %s26 = ssub.s32 256, 256
      %27 = vsyncadd [#allocation7], %s26
      %s28 = sshll.u32 [#allocation6], 4
      %s29 = int_to_ptr.vmem [resolvable:$true] %s28
      %34 = dma.hbm_to_vmem [thread:$0]  %s1, 256, %s29, [#allocation7], 64, 64, 4
    $region9: #{tpu_custom_call.1} parent=1 // pred_fallthru
      _
    // Predicated region
    $region10: #{tpu_custom_call.1} parent=1 // pred_check
      _
    $region11: #{tpu_custom_call.1} parent=1 // pred_check_branch
      %36 = sbr.rel (0) target = $region13
    $region12: #{tpu_custom_call.1} parent=1 // pred_region
      _
    $region13: #{tpu_custom_call.1} parent=1 // pred_fallthru
      _
    // Predicated region
    $region14: #{tpu_custom_call.1} parent=1 // pred_check
      _
    $region15: #{tpu_custom_call.1} parent=1 // pred_check_branch
      %38 = sbr.rel (0) target = $region17
    $region16: #{tpu_custom_call.1} parent=1 // pred_region
      %39 = dma.done [#allocation4], 256
    $region17: #{tpu_custom_call.1} parent=1 // pred_fallthru
      _
    // Predicated region
    $region18: #{tpu_custom_call.1} parent=1 // pred_check
      _
    $region19: #{tpu_custom_call.1} parent=1 // pred_check_branch
      %41 = sbr.rel (0) target = $region21
    $region20: #{tpu_custom_call.1} parent=1 // pred_region
      %42 = dma.done [#allocation7], 256
    $region21: #{tpu_custom_call.1} parent=1 // pred_fallthru
      _
    %p44 = scmp.eq.s32.totalorder 0, 0
    // Predicated region
    $region22: #{tpu_custom_call.1} parent=1 // pred_check
      %p45 = pneg %p44
    $region23: #{tpu_custom_call.1} parent=1 // pred_check_branch
      %47 = sbr.rel (%p45) target = $region25
    $region24: #{tpu_custom_call.1} parent=1 // pred_region
      %48 = vst [vmem:[#allocation2] sm:$0xff] 0.0
      %49 = vst [vmem:[#allocation2 + $0x8] sm:$0xff] 0.0
    $region25: #{tpu_custom_call.1} parent=1 // pred_fallthru
      _
    %v50 = vld [vmem:[#allocation2] sm:$0xff]
    %v51 = vld [vmem:[#allocation2 + $0x8] sm:$0xff]
    %v52 = vld [vmem:[#allocation3] sm:$0xff]
    %v53 = vld [vmem:[#allocation3 + $0x8] sm:$0xff]
    %v54 = vpack.c.bf16 %v53, %v52
    %v55 = vld [vmem:[#allocation6] sm:$0xf]
    %v56 = vld [vmem:[#allocation6 + $0x4] sm:$0xf]
    %v57 = vld [vmem:[#allocation6 + $0x8] sm:$0xf]
    %v58 = vld [vmem:[#allocation6 + $0xc] sm:$0xf]
    %v63 = vunpack.c.l.b16 %v55
    %v64 = vunpack.c.l.b16 %v56
    %v65 = vunpack.c.l.b16 %v57
    %v66 = vunpack.c.l.b16 %v58
    %v67 = vpack.c.b16 %v64, %v63
    %v68 = vpack.c.b16 %v66, %v65
    %vm71 = vcmask 261120
    %v73 = vsel %vm71, %v54, 0
    %75 = vmatprep.subr.bf16.mxu0 0
    %76 = vmatpush1.bf16.msra.mxu0 0
    %77 = vmatprep.subr.bf16.mxu0 0
    %78 = vmatpush1.bf16.msra.mxu0 0
    %79 = vmatprep.subr.bf16.mxu0 0
    %80 = vmatpush1.bf16.msra.mxu0 0
    %81 = vmatprep.subr.bf16.mxu0 0
    %82 = vmatpush1.bf16.msra.mxu0 0
    %83 = vmatprep.subr.bf16.mxu0 0
    %84 = vmatpush1.bf16.msra.mxu0 0
    %85 = vmatprep.subr.bf16.mxu0 0
    %86 = vmatpush1.bf16.msra.mxu0 0
    %87 = vmatprep.subr.bf16.mxu0 0
    %88 = vmatpush1.bf16.msra.mxu0 %v68
    %89 = vmatprep.subr.bf16.mxu0 0
    %90 = vmatpush1.bf16.msra.mxu0 %v67
    %91 = vmatprep.subr.bf16.mxu0 0
    %92 = vmatpush2.bf16.msra.mxu0 0
    %93 = vmatprep.subr.bf16.mxu0 0
    %94 = vmatpush2.bf16.msra.mxu0 0
    %95 = vmatprep.subr.bf16.mxu0 0
    %96 = vmatpush2.bf16.msra.mxu0 0
    %97 = vmatprep.subr.bf16.mxu0 0
    %98 = vmatpush2.bf16.msra.mxu0 0
    %99 = vmatprep.subr.bf16.mxu0 0
    %100 = vmatpush2.bf16.msra.mxu0 0
    %101 = vmatprep.subr.bf16.mxu0 0
    %102 = vmatpush2.bf16.msra.mxu0 0
    %103 = vmatprep.subr.bf16.mxu0 0
    %104 = vmatpush2.bf16.msra.mxu0 0
    %105 = vmatprep.subr.bf16.mxu0 0
    %106 = vmatpush2.bf16.msra.mxu0 0
    %107 = vmatprep.mubr.bf16.mxu0 0
    %108 = vmatmul.mubr.bf16.gmra.mxu0 %v73
    %v109 = vpop.f32.mrf.mxu0
    %v110 = vadd.f32 0.0, %v109
    %v111 = vpop.f32.mrf.mxu0
    %v112 = vpop.f32.mrf.mxu0
    %v113 = vadd.f32 0.0, %v112
    %v114 = vpop.f32.mrf.mxu0
    %115 = vdwg.mxu0
    %v116 = vadd.f32 %v50, %v110
    %v117 = vadd.f32 %v51, %v113
    %118 = vst [vmem:[#allocation2] sm:$0xff] %v116
    %119 = vst [vmem:[#allocation2 + $0x8] sm:$0xff] %v117
    // Predicated region
    $region26: #{tpu_custom_call.1} parent=1 // pred_check
      %p120 = pneg %p44
    $region27: #{tpu_custom_call.1} parent=1 // pred_check_branch
      %122 = sbr.rel (%p120) target = $region29
    $region28: #{tpu_custom_call.1} parent=1 // pred_region
      %v123 = vld [vmem:[#allocation2] sm:$0xff]
      %v124 = vld [vmem:[#allocation2 + $0x8] sm:$0xff]
      %v125 = vld [vmem:[%s2] sm:$0x1]
      %v127 = vlaneseq
      %v128 = vshrl.u32 %v127, 7
      %v129 = vsub.s32 0, %v128
      %v130 = vrot.slane %v125, %v129
      %v132 = vadd.f32 %v123, %v130
      %v133 = vadd.f32 %v124, %v130
      %134 = vmax.xlane.f32.xlu0 %v132
      %v135 = vpop.xlane.xlu0 %134
      %136 = vmax.xlane.f32.xlu0 %v133
      %v137 = vpop.xlane.xlu0 %136
      %v138 = vsub.f32 %v132, %v135
      %v139 = vsub.f32 %v133, %v137
      %v140 = vmul.f32 %v138, 1.442695
      %v141 = vpow.pop %v140
      %v142 = vmul.f32 %v139, 1.442695
      %v143 = vpow.pop %v142
      %144 = vadd.xlane.f32.xlu0 %v141
      %v145 = vpop.xlane.xlu0 %144
      %146 = vadd.xlane.f32.xlu0 %v143
      %v147 = vpop.xlane.xlu0 %146
      %v148 = vlog2.pop %v145
      %v149 = vmul.f32 %v148, 0.6931472
      %v150 = vlog2.pop %v147
      %v151 = vmul.f32 %v150, 0.6931472
      %v152 = vsub.f32 %v138, %v149
      %v153 = vsub.f32 %v139, %v151
      %154 = vst [vmem:[#allocation8] sm:$0xff] %v152
      %155 = vst [vmem:[#allocation8 + $0x8] sm:$0xff] %v153
    $region29: #{tpu_custom_call.1} parent=1 // pred_fallthru
      _
    // Predicated region
    $region30: #{tpu_custom_call.1} parent=1 // pred_check
      _
    $region31: #{tpu_custom_call.1} parent=1 // pred_check_branch
      %157 = sbr.rel (0) target = $region33
    $region32: #{tpu_custom_call.1} parent=1 // pred_region
      %s159 = ssub.s32 256, 256
      %160 = vsyncadd [#allocation5], %s159
      %s161 = sshll.u32 [#allocation8], 4
      %s162 = int_to_ptr.vmem [resolvable:$true] %s161
      %167 = dma.vmem_to_hbm [thread:$0]  %s162, 256, %s3, [#allocation5], 128, 128, 8
    $region33: #{tpu_custom_call.1} parent=1 // pred_fallthru
      _
    // Predicated region
    $region34: #{tpu_custom_call.1} parent=1 // pred_check
      _
    $region35: #{tpu_custom_call.1} parent=1 // pred_check_branch
      %169 = sbr.rel (0) target = $region37
    $region36: #{tpu_custom_call.1} parent=1 // pred_region
      %170 = dma.done [#allocation5], 256
    $region37: #{tpu_custom_call.1} parent=1 // pred_fallthru
      _
    %171 = vsyncpa [#allocation4], 1
    %172 = vsyncpa [#allocation7], 1
    %173 = vsyncpa [#allocation5], 1

</llo_original>
